<compile_context>
chip_gen: v6e
topology: v6e:2x2x1
jax: 0.10.0
libtpu: 0.0.40
codegen_flags: <defaults>
</compile_context>

<pallas_src>
import functools

import jax
import jax.numpy as jnp
from jax.experimental import pallas as pl
from jax.experimental.pallas import tpu as pltpu

_LANE = 128
_SUBLANE = 8


def _cdiv(a, b):
    return (a + b - 1) // b


def _round_up(x, m):
    return _cdiv(x, m) * m


_NAMED_ACTS = {
    "tanh": jnp.tanh,
    "relu": lambda y: jnp.maximum(y, 0.0),
    "identity": lambda y: y,
    "sigmoid": jax.nn.sigmoid,
}
_EUP_ACTS = ("tanh", "sigmoid")  # transcendentals -> EUP slot


def _resolve_act(act):
    if callable(act):
        return act
    try:
        return _NAMED_ACTS[act]
    except KeyError as e:
        raise ValueError(f"unknown nonlinearity: {act!r}") from e


def _vmem_capacity_bytes():
    """Per-TensorCore VMEM; conservative (v7x-sized) fallback if query fails."""
    try:
        return int(pltpu.get_tpu_info().vmem_capacity_bytes)
    except Exception:
        return 64 * 1024 * 1024


def _pick_batch_tile(batch, max_padded_dim, batch_tile):
    cap = batch_tile
    if max_padded_dim >= 512:          # keep live f32 hid/y chain from spilling
        cap = min(cap, 128)
    tm = min(cap, _round_up(batch, _SUBLANE))
    # Prefer >=2 grid steps so the "parallel" axis can shard over v7x's 2 TCs.
    if batch > _SUBLANE and _round_up(batch, tm) // tm < 2:
        tm = _round_up(_cdiv(batch, 2), _SUBLANE)
    # Shrink tm so the final tile is not mostly padding (same step count).
    steps = _cdiv(batch, tm)
    tm = _round_up(_cdiv(batch, steps), _SUBLANE)
    return max(tm, _SUBLANE)


def _fused_vmem_bytes(padded_dims, tm, compute_itemsize, io_itemsize=4):
    """Realistic fused-path footprint: resident weights (1 buffer), biases,
    2x streamed in/out tiles, and the live f32 hid/y intermediates."""
    w = sum(k * n for k, n in zip(padded_dims[:-1], padded_dims[1:])) * compute_itemsize
    b = sum(padded_dims[1:]) * 4
    x_tiles = 2 * tm * padded_dims[0] * io_itemsize
    o_tiles = 2 * tm * padded_dims[-1] * io_itemsize
    live = 3 * tm * max(padded_dims) * 4
    return w + b + x_tiles + o_tiles + live


# ---------------------------------------------------------------------------
# Fused whole-MLP kernel: per-layer padded weights resident, batch tiles stream
# ---------------------------------------------------------------------------
def _fused_mlp_kernel(*refs, acts, compute_dtype):
    # refs = (x_ref, w_0, b_0, w_1, b_1, ..., w_{L-1}, b_{L-1}, o_ref)
    x_ref, o_ref = refs[0], refs[-1]
    hid = x_ref[...].astype(jnp.float32)
    for l, act in enumerate(acts):                      # static L -> unrolled
        w_ref = refs[1 + 2 * l]
        b_ref = refs[2 + 2 * l]
        y = jnp.dot(hid.astype(compute_dtype), w_ref[...],
                    preferred_element_type=jnp.float32)  # f32 accumulation
        hid = act(y + b_ref[...])                        # bias + act in f32
    o_ref[...] = hid.astype(o_ref.dtype)


def fused_mlp_forward(x, w_pads, b_pads, acts, padded_dims, out_dim, *,
                      batch_tile, compute_dtype, vmem_limit_bytes,
                      cost_estimate=None):
    B, Din = x.shape
    p_in, p_out = padded_dims[0], padded_dims[-1]
    tm = _pick_batch_tile(B, max(padded_dims), batch_tile)
    Bpad = _round_up(B, tm)

    x_pad = jnp.zeros((Bpad, p_in), dtype=x.dtype).at[:B, :Din].set(x)

    kernel = functools.partial(_fused_mlp_kernel, acts=tuple(acts),
                               compute_dtype=compute_dtype)

    def call(use_buffered):
        resident = dict(pipeline_mode=pl.Buffered(1)) if use_buffered else {}
        in_specs = [pl.BlockSpec((tm, p_in), lambda i: (i, 0))]
        operands = [x_pad]
        for w, b in zip(w_pads, b_pads):
            in_specs.append(pl.BlockSpec(w.shape, lambda i: (0, 0), **resident))
            in_specs.append(pl.BlockSpec(b.shape, lambda i: (0, 0), **resident))
            operands += [w, b]
        return pl.pallas_call(
            kernel,
            out_shape=jax.ShapeDtypeStruct((Bpad, p_out), x.dtype),
            grid=(Bpad // tm,),
            in_specs=in_specs,
            out_specs=pl.BlockSpec((tm, p_out), lambda i: (i, 0)),
            compiler_params=pltpu.CompilerParams(
                dimension_semantics=("parallel",),
                vmem_limit_bytes=vmem_limit_bytes,
            ),
            cost_estimate=cost_estimate,
        )(*operands)

    try:
        out = call(use_buffered=True)
    except Exception:   # fallback if this JAX build rejects Buffered(1)
        out = call(use_buffered=False)

    return out[:B, :out_dim]


# ---------------------------------------------------------------------------
# Tiled fallback: one layer, M/N/K-tiled (weights too large to stay resident)
# ---------------------------------------------------------------------------
def _layer_tiled_kernel(x_ref, w_ref, b_ref, o_ref, *scratch, act):
    # f32 outputs accumulate directly into the resident output block.
    acc_ref = scratch[0] if scratch else o_ref

    @pl.when(pl.program_id(2) == 0)
    def _init():
        acc_ref[...] = jnp.zeros_like(acc_ref)

    acc_ref[...] += jnp.dot(x_ref[...], w_ref[...],
                            preferred_element_type=jnp.float32)

    @pl.when(pl.program_id(2) == pl.num_programs(2) - 1)
    def _finalize():
        o_ref[...] = act(acc_ref[...] + b_ref[...]).astype(o_ref.dtype)


def ff_layer_tiled(x, w_pad, b_pad, act, *, din, dout, tm, tn, tk,
                   compute_dtype, out_dtype, vmem_limit_bytes):
    B = x.shape[0]
    Kp, Np = w_pad.shape
    tm = min(tm, _round_up(B, _SUBLANE))
    Mp = _round_up(B, tm)

    x_pad = jnp.zeros((Mp, Kp), compute_dtype).at[:B, :din].set(
        x.astype(compute_dtype))

    use_scratch = jnp.dtype(out_dtype) != jnp.dtype(jnp.float32)
    scratch_shapes = [pltpu.VMEM((tm, tn), jnp.float32)] if use_scratch else []

    out = pl.pallas_call(
        functools.partial(_layer_tiled_kernel, act=act),
        out_shape=jax.ShapeDtypeStruct((Mp, Np), out_dtype),
        grid=(Mp // tm, Np // tn, Kp // tk),
        in_specs=[
            pl.BlockSpec((tm, tk), lambda i, j, k: (i, k)),
            pl.BlockSpec((tk, tn), lambda i, j, k: (k, j)),
            pl.BlockSpec((1, tn), lambda i, j, k: (0, j)),
        ],
        out_specs=pl.BlockSpec((tm, tn), lambda i, j, k: (i, j)),
        scratch_shapes=scratch_shapes,
        compiler_params=pltpu.CompilerParams(
            dimension_semantics=("parallel", "parallel", "arbitrary"),
            vmem_limit_bytes=vmem_limit_bytes,
        ),
    )(x_pad, w_pad, b_pad)

    return out[:B, :dout]


# ---------------------------------------------------------------------------
# FeedForward "module": list of (W, b, nonlinearity) applied sequentially
# ---------------------------------------------------------------------------
class FeedForward:
    """JAX/Pallas forward-pass port of the PyTorch FeedForward module."""

    def __init__(self, layer_weights, biases, nonlinearities, *,
                 compute_dtype=jnp.float32, fuse=True, batch_tile=256):
        assert len(layer_weights) == len(biases) == len(nonlinearities)
        self.layer_weights = [jnp.asarray(w) for w in layer_weights]
        self.biases = [jnp.asarray(b).reshape(-1) for b in biases]
        self._nl_raw = list(nonlinearities)
        self.acts = tuple(_resolve_act(nl) for nl in nonlinearities)
        self.compute_dtype = jnp.dtype(compute_dtype)
        self.batch_tile = batch_tile

        dims = [self.layer_weights[0].shape[0]] + \
               [w.shape[1] for w in self.layer_weights]
        for w, din, dout in zip(self.layer_weights, dims[:-1], dims[1:]):
            assert w.shape == (din, dout), "layer shapes do not chain"
        for b, dout in zip(self.biases, dims[1:]):
            assert b.shape == (dout,), "bias shape mismatch"
        self.dims = dims
        self.in_dim, self.out_dim = dims[0], dims[-1]
        self.padded_dims = [_round_up(d, _LANE) for d in dims]

        # Device-derived VMEM budget (v5e/v6e: 128 MiB, v7x: 64 MiB per TC).
        vmem_cap = _vmem_capacity_bytes()
        self.vmem_limit_bytes = min(int(vmem_cap * 0.75), 100 * 1024 * 1024)

        tm_est = batch_tile if max(self.padded_dims) < 512 else min(batch_tile, 128)
        footprint = _fused_vmem_bytes(self.padded_dims, tm_est,
                                      self.compute_dtype.itemsize)
        self._use_fused = fuse and footprint <= int(0.8 * self.vmem_limit_bytes)

        if self._use_fused:
            # Per-layer padded, pre-cast weights (compute_dtype) and f32 biases.
            # Zero padding is numerically exact (padded rows/cols/lanes are 0).
            self._w_pads, self._b_pads = [], []
            for w, b, pin, pout, din, dout in zip(
                    self.layer_weights, self.biases,
                    self.padded_dims[:-1], self.padded_dims[1:],
                    dims[:-1], dims[1:]):
                wp = jnp.zeros((pin, pout), self.compute_dtype)
                wp = wp.at[:din, :dout].set(w.astype(self.compute_dtype))
                bp = jnp.zeros((1, pout), jnp.float32).at[0, :dout].set(
                    b.astype(jnp.float32))
                self._w_pads.append(wp)
                self._b_pads.append(bp)
        else:
            # Tiled fallback: pad & cast weights/biases ONCE here, not per call.
            if self.compute_dtype.itemsize <= 2:
                tm_d, tn_d, tk_d = 256, 512, 1024
            else:
                tm_d, tn_d, tk_d = 256, 256, 512
            self._tiled_layers = []
            for w, b, din, dout, act in zip(self.layer_weights, self.biases,
                                            dims[:-1], dims[1:], self.acts):
                tk = min(tk_d, _round_up(din, _LANE))
                tn = min(tn_d, _round_up(dout, _LANE))
                Kp, Np = _round_up(din, tk), _round_up(dout, tn)
                wp = jnp.zeros((Kp, Np), self.compute_dtype)
                wp = wp.at[:din, :dout].set(w.astype(self.compute_dtype))
                bp = jnp.zeros((1, Np), jnp.float32).at[0, :dout].set(
                    b.astype(jnp.float32))
                self._tiled_layers.append(
                    dict(w_pad=wp, b_pad=bp, act=act, din=din, dout=dout,
                         tm=tm_d, tn=tn, tk=tk))

    def _cost_estimate(self, batch):
        dot_elems = sum(k * n for k, n in zip(self.dims[:-1], self.dims[1:]))
        flops = 2 * batch * dot_elems
        transcendentals = batch * sum(
            dout for dout, nl in zip(self.dims[1:], self._nl_raw)
            if isinstance(nl, str) and nl in _EUP_ACTS)
        bytes_accessed = (batch * (self.dims[0] + self.dims[-1]) * 4
                          + dot_elems * self.compute_dtype.itemsize
                          + sum(self.dims[1:]) * 4)
        return pl.CostEstimate(flops=flops, transcendentals=transcendentals,
                               bytes_accessed=bytes_accessed)

    def __call__(self, inputs):
        inputs = jnp.asarray(inputs)
        lead = inputs.shape[:-1]
        x2d = inputs.reshape(-1, inputs.shape[-1])
        assert x2d.shape[-1] == self.in_dim
        if self._use_fused:
            out = fused_mlp_forward(
                x2d, self._w_pads, self._b_pads, self.acts, self.padded_dims,
                self.out_dim, batch_tile=self.batch_tile,
                compute_dtype=self.compute_dtype,
                vmem_limit_bytes=self.vmem_limit_bytes,
                cost_estimate=self._cost_estimate(x2d.shape[0]))
        else:
            hid, out_dtype = x2d, x2d.dtype
            for spec in self._tiled_layers:
                hid = ff_layer_tiled(hid, spec["w_pad"], spec["b_pad"],
                                     spec["act"], din=spec["din"],
                                     dout=spec["dout"], tm=spec["tm"],
                                     tn=spec["tn"], tk=spec["tk"],
                                     compute_dtype=self.compute_dtype,
                                     out_dtype=out_dtype,
                                     vmem_limit_bytes=self.vmem_limit_bytes)
            out = hid
        return out.reshape(*lead, self.out_dim)

    # TODO(synk): get_pre/post_activations helpers and autograd (nn.Parameter
    # training) are out of scope for the forward-pass kernel.


# ---------------------------------------------------------------------------
# Pure-JAX reference (full-precision matmuls) for correctness check
# ---------------------------------------------------------------------------
def _ref_forward(x, layer_weights, biases, nonlinearities):
    hid = x
    for w, b, nl in zip(layer_weights, biases, nonlinearities):
        hid = _resolve_act(nl)(
            jnp.dot(hid, w, precision=jax.lax.Precision.HIGHEST) + b)
    return hid


if __name__ == "__main__":
    key = jax.random.PRNGKey(0)

    # Small non-uniform MLP: 8 (batch) x 32 -> 64 -> 64 -> 16
    batch = 8
    dims = [32, 64, 64, 16]
    nonlinearities = ["tanh", "relu", "identity"]

    keys = jax.random.split(key, 2 * len(nonlinearities) + 1)
    layer_weights, biases = [], []
    for li, (din, dout) in enumerate(zip(dims[:-1], dims[1:])):
        scale = 1.0 / (din ** 0.5)
        w = jax.random.normal(keys[2 * li], (din, dout), jnp.float32) * scale
        b = jax.random.normal(keys[2 * li + 1], (dout,), jnp.float32) * 0.1
        layer_weights.append(w)
        biases.append(b)
    x = jax.random.normal(keys[-1], (batch, dims[0]), jnp.float32)

    ref = _ref_forward(x, layer_weights, biases, nonlinearities)

    # 1) Fused single-kernel path, f32 MXU operands.
    model = FeedForward(layer_weights, biases, nonlinearities)
    assert model._use_fused
    out = jax.block_until_ready(model(x))
    assert out.shape == (batch, dims[-1])
    assert jnp.allclose(out, ref, atol=1e-3, rtol=1e-3), "fused f32 mismatch"

    # 2) Fused path with bf16 MXU operands (recommended on v6e/v7x), f32 accum.
    model_bf16 = FeedForward(layer_weights, biases, nonlinearities,
                             compute_dtype=jnp.bfloat16)
    out_bf16 = jax.block_until_ready(model_bf16(x))
    assert out_bf16.shape == (batch, dims[-1])
    assert jnp.allclose(out_bf16, ref, atol=7e-2, rtol=7e-2), "fused bf16 mismatch"

    # 3) Tiled per-layer fallback path (used when weights don't fit VMEM).
    model_tiled = FeedForward(layer_weights, biases, nonlinearities, fuse=False)
    out_tiled = jax.block_until_ready(model_tiled(x))
    assert out_tiled.shape == (batch, dims[-1])
    assert jnp.allclose(out_tiled, ref, atol=1e-3, rtol=1e-3), "tiled mismatch"

    print("KERNEL_OK")
</pallas_src>

<mosaic_0001>
module attributes {stable_mosaic.version = 11 : i64} {
  func.func @_fused_mlp_kernel(%arg0: i32, %arg1: memref<8x128xf32, #tpu.memory_space<vmem>>, %arg2: memref<128x128xf32, #tpu.memory_space<vmem>>, %arg3: memref<1x128xf32, #tpu.memory_space<vmem>>, %arg4: memref<128x128xf32, #tpu.memory_space<vmem>>, %arg5: memref<1x128xf32, #tpu.memory_space<vmem>>, %arg6: memref<128x128xf32, #tpu.memory_space<vmem>>, %arg7: memref<1x128xf32, #tpu.memory_space<vmem>>, %arg8: memref<8x128xf32, #tpu.memory_space<vmem>>) attributes {dimension_semantics = [#tpu.dimension_semantics<parallel>], iteration_bounds = array<i64: 1>, scalar_prefetch = 0 : i64, scratch_operands = 0 : i64, tpu.core_type = #tpu.core_type<tc>, window_params = [{transform_indices = @transform_0, window_bounds = array<i64: 8, 128>}, {pipeline_mode = #tpu.pipeline_mode<synchronous>, transform_indices = @transform_1, window_bounds = array<i64: 128, 128>}, {pipeline_mode = #tpu.pipeline_mode<synchronous>, transform_indices = @transform_2, window_bounds = array<i64: 1, 128>}, {pipeline_mode = #tpu.pipeline_mode<synchronous>, transform_indices = @transform_3, window_bounds = array<i64: 128, 128>}, {pipeline_mode = #tpu.pipeline_mode<synchronous>, transform_indices = @transform_4, window_bounds = array<i64: 1, 128>}, {pipeline_mode = #tpu.pipeline_mode<synchronous>, transform_indices = @transform_5, window_bounds = array<i64: 128, 128>}, {pipeline_mode = #tpu.pipeline_mode<synchronous>, transform_indices = @transform_6, window_bounds = array<i64: 1, 128>}, {transform_indices = @transform_7, window_bounds = array<i64: 8, 128>}]} {
    %c0 = arith.constant 0 : index
    %c0_0 = arith.constant 0 : index
    %0 = vector.load %arg1[%c0, %c0_0] : memref<8x128xf32, #tpu.memory_space<vmem>>, vector<8x128xf32>
    %c0_1 = arith.constant 0 : index
    %c0_2 = arith.constant 0 : index
    %1 = vector.load %arg2[%c0_1, %c0_2] : memref<128x128xf32, #tpu.memory_space<vmem>>, vector<128x128xf32>
    %cst = arith.constant dense<0.000000e+00> : vector<8x128xf32>
    %2 = tpu.matmul %0, %1, %cst {dimension_numbers = #tpu.dot_dimension_numbers<[1], [0], [0], [1], [0, 0, 1, 1], [], []>} : vector<8x128xf32>, vector<128x128xf32>, vector<8x128xf32> -> vector<8x128xf32>
    %c0_3 = arith.constant 0 : index
    %c0_4 = arith.constant 0 : index
    %3 = vector.load %arg3[%c0_3, %c0_4] : memref<1x128xf32, #tpu.memory_space<vmem>>, vector<1x128xf32>
    %4 = vector.broadcast %3 : vector<1x128xf32> to vector<8x128xf32>
    %5 = arith.addf %2, %4 : vector<8x128xf32>
    %6 = math.tanh %5 : vector<8x128xf32>
    %c0_5 = arith.constant 0 : index
    %c0_6 = arith.constant 0 : index
    %7 = vector.load %arg4[%c0_5, %c0_6] : memref<128x128xf32, #tpu.memory_space<vmem>>, vector<128x128xf32>
    %cst_7 = arith.constant dense<0.000000e+00> : vector<8x128xf32>
    %8 = tpu.matmul %6, %7, %cst_7 {dimension_numbers = #tpu.dot_dimension_numbers<[1], [0], [0], [1], [0, 0, 1, 1], [], []>} : vector<8x128xf32>, vector<128x128xf32>, vector<8x128xf32> -> vector<8x128xf32>
    %c0_8 = arith.constant 0 : index
    %c0_9 = arith.constant 0 : index
    %9 = vector.load %arg5[%c0_8, %c0_9] : memref<1x128xf32, #tpu.memory_space<vmem>>, vector<1x128xf32>
    %10 = vector.broadcast %9 : vector<1x128xf32> to vector<8x128xf32>
    %11 = arith.addf %8, %10 : vector<8x128xf32>
    %cst_10 = arith.constant 0.000000e+00 : f32
    %12 = vector.broadcast %cst_10 : f32 to vector<8x128xf32>
    %13 = arith.maximumf %11, %12 : vector<8x128xf32>
    %c0_11 = arith.constant 0 : index
    %c0_12 = arith.constant 0 : index
    %14 = vector.load %arg6[%c0_11, %c0_12] : memref<128x128xf32, #tpu.memory_space<vmem>>, vector<128x128xf32>
    %cst_13 = arith.constant dense<0.000000e+00> : vector<8x128xf32>
    %15 = tpu.matmul %13, %14, %cst_13 {dimension_numbers = #tpu.dot_dimension_numbers<[1], [0], [0], [1], [0, 0, 1, 1], [], []>} : vector<8x128xf32>, vector<128x128xf32>, vector<8x128xf32> -> vector<8x128xf32>
    %c0_14 = arith.constant 0 : index
    %c0_15 = arith.constant 0 : index
    %16 = vector.load %arg7[%c0_14, %c0_15] : memref<1x128xf32, #tpu.memory_space<vmem>>, vector<1x128xf32>
    %17 = vector.broadcast %16 : vector<1x128xf32> to vector<8x128xf32>
    %18 = arith.addf %15, %17 : vector<8x128xf32>
    %c0_16 = arith.constant 0 : index
    %c0_17 = arith.constant 0 : index
    %19 = vector.load %arg8[%c0_16, %c0_17] : memref<8x128xf32, #tpu.memory_space<vmem>>, vector<8x128xf32>
    tpu.vector_store %arg8[%c0_16, %c0_17], %18 {strides = array<i32>} : memref<8x128xf32, #tpu.memory_space<vmem>>, vector<8x128xf32>,
    return
  }
  func.func @transform_0(%arg0: i32) -> (i32, i32) {
    %c0_i32 = arith.constant 0 : i32
    %c0_i32_0 = arith.constant 0 : i32
    return %arg0, %c0_i32 : i32, i32
  }
  func.func @transform_1(%arg0: i32) -> (i32, i32) {
    %c0_i32 = arith.constant 0 : i32
    %c0_i32_0 = arith.constant 0 : i32
    %c0_i32_1 = arith.constant 0 : i32
    return %c0_i32, %c0_i32_0 : i32, i32
  }
  func.func @transform_2(%arg0: i32) -> (i32, i32) {
    %c0_i32 = arith.constant 0 : i32
    %c0_i32_0 = arith.constant 0 : i32
    %c0_i32_1 = arith.constant 0 : i32
    return %c0_i32, %c0_i32_0 : i32, i32
  }
  func.func @transform_3(%arg0: i32) -> (i32, i32) {
    %c0_i32 = arith.constant 0 : i32
    %c0_i32_0 = arith.constant 0 : i32
    %c0_i32_1 = arith.constant 0 : i32
    return %c0_i32, %c0_i32_0 : i32, i32
  }
  func.func @transform_4(%arg0: i32) -> (i32, i32) {
    %c0_i32 = arith.constant 0 : i32
    %c0_i32_0 = arith.constant 0 : i32
    %c0_i32_1 = arith.constant 0 : i32
    return %c0_i32, %c0_i32_0 : i32, i32
  }
  func.func @transform_5(%arg0: i32) -> (i32, i32) {
    %c0_i32 = arith.constant 0 : i32
    %c0_i32_0 = arith.constant 0 : i32
    %c0_i32_1 = arith.constant 0 : i32
    return %c0_i32, %c0_i32_0 : i32, i32
  }
  func.func @transform_6(%arg0: i32) -> (i32, i32) {
    %c0_i32 = arith.constant 0 : i32
    %c0_i32_0 = arith.constant 0 : i32
    %c0_i32_1 = arith.constant 0 : i32
    return %c0_i32, %c0_i32_0 : i32, i32
  }
  func.func @transform_7(%arg0: i32) -> (i32, i32) {
    %c0_i32 = arith.constant 0 : i32
    %c0_i32_0 = arith.constant 0 : i32
    return %arg0, %c0_i32 : i32, i32
  }
}

module attributes {stable_mosaic.version = 11 : i64} {
  func.func @_fused_mlp_kernel(%arg0: i32, %arg1: memref<8x128xf32, #tpu.memory_space<vmem>>, %arg2: memref<128x128xf32, #tpu.memory_space<vmem>>, %arg3: memref<1x128xf32, #tpu.memory_space<vmem>>, %arg4: memref<128x128xf32, #tpu.memory_space<vmem>>, %arg5: memref<1x128xf32, #tpu.memory_space<vmem>>, %arg6: memref<128x128xf32, #tpu.memory_space<vmem>>, %arg7: memref<1x128xf32, #tpu.memory_space<vmem>>, %arg8: memref<8x128xf32, #tpu.memory_space<vmem>>) attributes {dimension_semantics = [#tpu.dimension_semantics<parallel>], iteration_bounds = array<i64: 1>, scalar_prefetch = 0 : i64, scratch_operands = 0 : i64, tpu.core_type = #tpu.core_type<tc>, window_params = [{transform_indices = @transform_0, window_bounds = array<i64: 8, 128>}, {pipeline_mode = #tpu.pipeline_mode<synchronous>, transform_indices = @transform_1, window_bounds = array<i64: 128, 128>}, {pipeline_mode = #tpu.pipeline_mode<synchronous>, transform_indices = @transform_2, window_bounds = array<i64: 1, 128>}, {pipeline_mode = #tpu.pipeline_mode<synchronous>, transform_indices = @transform_3, window_bounds = array<i64: 128, 128>}, {pipeline_mode = #tpu.pipeline_mode<synchronous>, transform_indices = @transform_4, window_bounds = array<i64: 1, 128>}, {pipeline_mode = #tpu.pipeline_mode<synchronous>, transform_indices = @transform_5, window_bounds = array<i64: 128, 128>}, {pipeline_mode = #tpu.pipeline_mode<synchronous>, transform_indices = @transform_6, window_bounds = array<i64: 1, 128>}, {transform_indices = @transform_7, window_bounds = array<i64: 8, 128>}]} {
    %c0 = arith.constant 0 : index
    %c0_0 = arith.constant 0 : index
    %0 = vector.load %arg1[%c0, %c0_0] : memref<8x128xf32, #tpu.memory_space<vmem>>, vector<8x128xf32>
    %c0_1 = arith.constant 0 : index
    %c0_2 = arith.constant 0 : index
    %1 = vector.load %arg2[%c0_1, %c0_2] : memref<128x128xf32, #tpu.memory_space<vmem>>, vector<128x128xf32>
    %cst = arith.constant dense<0.000000e+00> : vector<8x128xf32>
    %2 = tpu.matmul %0, %1, %cst {dimension_numbers = #tpu.dot_dimension_numbers<[1], [0], [0], [1], [0, 0, 1, 1], [], []>} : vector<8x128xf32>, vector<128x128xf32>, vector<8x128xf32> -> vector<8x128xf32>
    %c0_3 = arith.constant 0 : index
    %c0_4 = arith.constant 0 : index
    %3 = vector.load %arg3[%c0_3, %c0_4] : memref<1x128xf32, #tpu.memory_space<vmem>>, vector<1x128xf32>
    %4 = vector.broadcast %3 : vector<1x128xf32> to vector<8x128xf32>
    %5 = arith.addf %2, %4 : vector<8x128xf32>
    %6 = math.tanh %5 : vector<8x128xf32>
    %c0_5 = arith.constant 0 : index
    %c0_6 = arith.constant 0 : index
    %7 = vector.load %arg4[%c0_5, %c0_6] : memref<128x128xf32, #tpu.memory_space<vmem>>, vector<128x128xf32>
    %cst_7 = arith.constant dense<0.000000e+00> : vector<8x128xf32>
    %8 = tpu.matmul %6, %7, %cst_7 {dimension_numbers = #tpu.dot_dimension_numbers<[1], [0], [0], [1], [0, 0, 1, 1], [], []>} : vector<8x128xf32>, vector<128x128xf32>, vector<8x128xf32> -> vector<8x128xf32>
    %c0_8 = arith.constant 0 : index
    %c0_9 = arith.constant 0 : index
    %9 = vector.load %arg5[%c0_8, %c0_9] : memref<1x128xf32, #tpu.memory_space<vmem>>, vector<1x128xf32>
    %10 = vector.broadcast %9 : vector<1x128xf32> to vector<8x128xf32>
    %11 = arith.addf %8, %10 : vector<8x128xf32>
    %cst_10 = arith.constant 0.000000e+00 : f32
    %12 = vector.broadcast %cst_10 : f32 to vector<8x128xf32>
    %13 = arith.maximumf %11, %12 : vector<8x128xf32>
    %c0_11 = arith.constant 0 : index
    %c0_12 = arith.constant 0 : index
    %14 = vector.load %arg6[%c0_11, %c0_12] : memref<128x128xf32, #tpu.memory_space<vmem>>, vector<128x128xf32>
    %cst_13 = arith.constant dense<0.000000e+00> : vector<8x128xf32>
    %15 = tpu.matmul %13, %14, %cst_13 {dimension_numbers = #tpu.dot_dimension_numbers<[1], [0], [0], [1], [0, 0, 1, 1], [], []>} : vector<8x128xf32>, vector<128x128xf32>, vector<8x128xf32> -> vector<8x128xf32>
    %c0_14 = arith.constant 0 : index
    %c0_15 = arith.constant 0 : index
    %16 = vector.load %arg7[%c0_14, %c0_15] : memref<1x128xf32, #tpu.memory_space<vmem>>, vector<1x128xf32>
    %17 = vector.broadcast %16 : vector<1x128xf32> to vector<8x128xf32>
    %18 = arith.addf %15, %17 : vector<8x128xf32>
    %c0_16 = arith.constant 0 : index
    %c0_17 = arith.constant 0 : index
    %19 = vector.load %arg8[%c0_16, %c0_17] : memref<8x128xf32, #tpu.memory_space<vmem>>, vector<8x128xf32>
    tpu.vector_store %arg8[%c0_16, %c0_17], %18 {strides = array<i32>} : memref<8x128xf32, #tpu.memory_space<vmem>>, vector<8x128xf32>,
    return
  }
  func.func @transform_0(%arg0: i32) -> (i32, i32) {
    %c0_i32 = arith.constant 0 : i32
    %c0_i32_0 = arith.constant 0 : i32
    return %arg0, %c0_i32 : i32, i32
  }
  func.func @transform_1(%arg0: i32) -> (i32, i32) {
    %c0_i32 = arith.constant 0 : i32
    %c0_i32_0 = arith.constant 0 : i32
    %c0_i32_1 = arith.constant 0 : i32
    return %c0_i32, %c0_i32_0 : i32, i32
  }
  func.func @transform_2(%arg0: i32) -> (i32, i32) {
    %c0_i32 = arith.constant 0 : i32
    %c0_i32_0 = arith.constant 0 : i32
    %c0_i32_1 = arith.constant 0 : i32
    return %c0_i32, %c0_i32_0 : i32, i32
  }
  func.func @transform_3(%arg0: i32) -> (i32, i32) {
    %c0_i32 = arith.constant 0 : i32
    %c0_i32_0 = arith.constant 0 : i32
    %c0_i32_1 = arith.constant 0 : i32
    return %c0_i32, %c0_i32_0 : i32, i32
  }
  func.func @transform_4(%arg0: i32) -> (i32, i32) {
    %c0_i32 = arith.constant 0 : i32
    %c0_i32_0 = arith.constant 0 : i32
    %c0_i32_1 = arith.constant 0 : i32
    return %c0_i32, %c0_i32_0 : i32, i32
  }
  func.func @transform_5(%arg0: i32) -> (i32, i32) {
    %c0_i32 = arith.constant 0 : i32
    %c0_i32_0 = arith.constant 0 : i32
    %c0_i32_1 = arith.constant 0 : i32
    return %c0_i32, %c0_i32_0 : i32, i32
  }
  func.func @transform_6(%arg0: i32) -> (i32, i32) {
    %c0_i32 = arith.constant 0 : i32
    %c0_i32_0 = arith.constant 0 : i32
    %c0_i32_1 = arith.constant 0 : i32
    return %c0_i32, %c0_i32_0 : i32, i32
  }
  func.func @transform_7(%arg0: i32) -> (i32, i32) {
    %c0_i32 = arith.constant 0 : i32
    %c0_i32_0 = arith.constant 0 : i32
    return %arg0, %c0_i32 : i32, i32
  }
}

</mosaic_0001>

<llo_original>
// kernel: tpu_custom_call.1
$region0: #{tpu_custom_call.1}
  #allocation0 [shape = 'u32[]', space=smem, size = 0x4, offset = 0x4, fixed_abs, tag = 'smem constant byte address 0x4 - core index']
  #allocation1 [shape = 'u32[144,128]{1,0:T(1,128)}', space=vmem, size = 0x12000, scoped, tag = 'internal scratch']
  %s0 = inlined_call_operand.hbm [shape: f32[8,128], index: 0, kind: input, shape index: {}]
  %s1 = inlined_call_operand.hbm [shape: f32[128,128], index: 1, kind: input, shape index: {}]
  %s2 = inlined_call_operand.vmem [shape: f32[1,128], index: 2, kind: input, shape index: {}]
  %s3 = inlined_call_operand.hbm [shape: f32[128,128], index: 3, kind: input, shape index: {}]
  %s4 = inlined_call_operand.vmem [shape: f32[1,128], index: 4, kind: input, shape index: {}]
  %s5 = inlined_call_operand.hbm [shape: f32[128,128], index: 5, kind: input, shape index: {}]
  %s6 = inlined_call_operand.vmem [shape: f32[1,128], index: 6, kind: input, shape index: {}]
  %s7 = inlined_call_operand.hbm [shape: f32[8,128], index: 7, kind: output, shape index: {}]
  %s8 = sld [smem:[#allocation0]]
  $region54: #{tpu_custom_call.1} parent=0
    _
  %s10 = ssub.s32 1, %s8
  %s11 = scalar_select 0, %s10, %s8
  $region1: #{tpu_custom_call.1} parent=0
    #allocation2 [shape = 'u8[4096]{0}', space=vmem, size = 0x1000, scoped, tag = 'input window, operand 0, single buffered']
    #allocation3 [shape = 's32[1]{0}', space=sflag, size = 0x4, scoped, tag = 'scoped memory for tpu_custom_call.1']
    #allocation4 [shape = 's32[1]{0}', space=sflag, size = 0x4, scoped, tag = 'scoped memory for tpu_custom_call.1']
    #allocation5 [shape = 'u8[65536]{0}', space=vmem, size = 0x10000, scoped, tag = 'input window, operand 1, single buffered']
    #allocation6 [shape = 's32[1]{0}', space=sflag, size = 0x4, scoped, tag = 'scoped memory for tpu_custom_call.1']
    #allocation7 [shape = 'u8[65536]{0}', space=vmem, size = 0x10000, scoped, tag = 'input window, operand 3, single buffered']
    #allocation8 [shape = 'u8[65536]{0}', space=vmem, size = 0x10000, scoped, tag = 'input window, operand 5, single buffered']
    #allocation9 [shape = 's32[1]{0}', space=sflag, size = 0x4, scoped, tag = 'scoped memory for tpu_custom_call.1']
    #allocation10 [shape = 'u8[4096]{0}', space=vmem, size = 0x1000, scoped, tag = 'output window, operand 0, single buffered']
    %12 = vsyncpa [#allocation3], 0
    %13 = vsyncpa [#allocation6], 0
    %14 = vsyncpa [#allocation9], 0
    %15 = vsyncpa [#allocation4], 0
    // Predicated region
    $region2: #{tpu_custom_call.1} parent=1 // pred_check
      _
    $region3: #{tpu_custom_call.1} parent=1 // pred_check_branch
      %17 = sbr.rel (0) target = $region5
    $region4: #{tpu_custom_call.1} parent=1 // pred_region
      %s19 = ssub.s32 128, 128
      %20 = vsyncadd [#allocation3], %s19
      %s22 = sshll.u32 [#allocation2], 4
      %s23 = int_to_ptr.vmem [resolvable:$true] %s22
      %25 = dma.hbm_to_vmem [thread:$0]  %s0, 128, %s23, [#allocation3]
    $region5: #{tpu_custom_call.1} parent=1 // pred_fallthru
      _
    // Predicated region
    $region6: #{tpu_custom_call.1} parent=1 // pred_check
      _
    $region7: #{tpu_custom_call.1} parent=1 // pred_check_branch
      %27 = sbr.rel (0) target = $region9
    $region8: #{tpu_custom_call.1} parent=1 // pred_region
      %s29 = ssub.s32 2048, 2048
      %30 = vsyncadd [#allocation6], %s29
      %s31 = sshll.u32 [#allocation5], 4
      %s32 = int_to_ptr.vmem [resolvable:$true] %s31
      %37 = dma.hbm_to_vmem [thread:$0]  %s1, 2048, %s32, [#allocation6], 128, 128, 8
    $region9: #{tpu_custom_call.1} parent=1 // pred_fallthru
      _
    // Predicated region
    $region10: #{tpu_custom_call.1} parent=1 // pred_check
      _
    $region11: #{tpu_custom_call.1} parent=1 // pred_check_branch
      %39 = sbr.rel (0) target = $region13
    $region12: #{tpu_custom_call.1} parent=1 // pred_region
      _
    $region13: #{tpu_custom_call.1} parent=1 // pred_fallthru
      _
    // Predicated region
    $region14: #{tpu_custom_call.1} parent=1 // pred_check
      _
    $region15: #{tpu_custom_call.1} parent=1 // pred_check_branch
      %41 = sbr.rel (0) target = $region17
    $region16: #{tpu_custom_call.1} parent=1 // pred_region
      %s43 = ssub.s32 2048, 2048
      %44 = vsyncadd [#allocation6], %s43
      %s45 = sshll.u32 [#allocation7], 4
      %s46 = int_to_ptr.vmem [resolvable:$true] %s45
      %51 = dma.hbm_to_vmem [thread:$0]  %s3, 2048, %s46, [#allocation6], 128, 128, 8
    $region17: #{tpu_custom_call.1} parent=1 // pred_fallthru
      _
    // Predicated region
    $region18: #{tpu_custom_call.1} parent=1 // pred_check
      _
    $region19: #{tpu_custom_call.1} parent=1 // pred_check_branch
      %53 = sbr.rel (0) target = $region21
    $region20: #{tpu_custom_call.1} parent=1 // pred_region
      _
    $region21: #{tpu_custom_call.1} parent=1 // pred_fallthru
      _
    // Predicated region
    $region22: #{tpu_custom_call.1} parent=1 // pred_check
      _
    $region23: #{tpu_custom_call.1} parent=1 // pred_check_branch
      %55 = sbr.rel (0) target = $region25
    $region24: #{tpu_custom_call.1} parent=1 // pred_region
      %s57 = ssub.s32 2048, 2048
      %58 = vsyncadd [#allocation9], %s57
      %s59 = sshll.u32 [#allocation8], 4
      %s60 = int_to_ptr.vmem [resolvable:$true] %s59
      %65 = dma.hbm_to_vmem [thread:$0]  %s5, 2048, %s60, [#allocation9], 128, 128, 8
    $region25: #{tpu_custom_call.1} parent=1 // pred_fallthru
      _
    // Predicated region
    $region26: #{tpu_custom_call.1} parent=1 // pred_check
      _
    $region27: #{tpu_custom_call.1} parent=1 // pred_check_branch
      %67 = sbr.rel (0) target = $region29
    $region28: #{tpu_custom_call.1} parent=1 // pred_region
      _
    $region29: #{tpu_custom_call.1} parent=1 // pred_fallthru
      _
    // Predicated region
    $region30: #{tpu_custom_call.1} parent=1 // pred_check
      _
    $region31: #{tpu_custom_call.1} parent=1 // pred_check_branch
      %69 = sbr.rel (0) target = $region33
    $region32: #{tpu_custom_call.1} parent=1 // pred_region
      %70 = dma.done [#allocation3], 128
    $region33: #{tpu_custom_call.1} parent=1 // pred_fallthru
      _
    // Predicated region
    $region34: #{tpu_custom_call.1} parent=1 // pred_check
      _
    $region35: #{tpu_custom_call.1} parent=1 // pred_check_branch
      %72 = sbr.rel (0) target = $region37
    $region36: #{tpu_custom_call.1} parent=1 // pred_region
      %73 = dma.done [#allocation6], 2048
    $region37: #{tpu_custom_call.1} parent=1 // pred_fallthru
      _
    // Predicated region
    $region38: #{tpu_custom_call.1} parent=1 // pred_check
      _
    $region39: #{tpu_custom_call.1} parent=1 // pred_check_branch
      %75 = sbr.rel (0) target = $region41
    $region40: #{tpu_custom_call.1} parent=1 // pred_region
      %76 = dma.done [#allocation6], 2048
    $region41: #{tpu_custom_call.1} parent=1 // pred_fallthru
      _
    // Predicated region
    $region42: #{tpu_custom_call.1} parent=1 // pred_check
      _
    $region43: #{tpu_custom_call.1} parent=1 // pred_check_branch
      %78 = sbr.rel (0) target = $region45
    $region44: #{tpu_custom_call.1} parent=1 // pred_region
      %79 = dma.done [#allocation9], 2048
    $region45: #{tpu_custom_call.1} parent=1 // pred_fallthru
      _
    %v80 = vld [vmem:[#allocation2] sm:$0xff]
    %v81 = vld [vmem:[#allocation5] sm:$0xff]
    %v82 = vld [vmem:[#allocation5 + $0x8] sm:$0xff]
    %v83 = vld [vmem:[#allocation5 + $0x10] sm:$0xff]
    %v84 = vld [vmem:[#allocation5 + $0x18] sm:$0xff]
    %v85 = vld [vmem:[#allocation5 + $0x20] sm:$0xff]
    %v86 = vld [vmem:[#allocation5 + $0x28] sm:$0xff]
    %v87 = vld [vmem:[#allocation5 + $0x30] sm:$0xff]
    %v88 = vld [vmem:[#allocation5 + $0x38] sm:$0xff]
    %v89 = vld [vmem:[#allocation5 + $0x40] sm:$0xff]
    %v90 = vld [vmem:[#allocation5 + $0x48] sm:$0xff]
    %v91 = vld [vmem:[#allocation5 + $0x50] sm:$0xff]
    %v92 = vld [vmem:[#allocation5 + $0x58] sm:$0xff]
    %v93 = vld [vmem:[#allocation5 + $0x60] sm:$0xff]
    %v94 = vld [vmem:[#allocation5 + $0x68] sm:$0xff]
    %v95 = vld [vmem:[#allocation5 + $0x70] sm:$0xff]
    %v96 = vld [vmem:[#allocation5 + $0x78] sm:$0xff]
    %v97 = vld [vmem:[%s2] sm:$0x1]
    %v99 = vlaneseq
    %v100 = vshrl.u32 %v99, 7
    %v101 = vsub.s32 0, %v100
    %v102 = vrot.slane %v97, %v101
    %104 = vmatprep.subr.mxu0 0.0
    %105 = vmatpush1.msra.mxu0 %v96
    %106 = vmatprep.subr.mxu0 0.0
    %107 = vmatpush1.msra.mxu0 %v95
    %108 = vmatprep.subr.mxu0 0.0
    %109 = vmatpush1.msra.mxu0 %v94
    %110 = vmatprep.subr.mxu0 0.0
    %111 = vmatpush1.msra.mxu0 %v93
    %112 = vmatprep.subr.mxu0 0.0
    %113 = vmatpush1.msra.mxu0 %v92
    %114 = vmatprep.subr.mxu0 0.0
    %115 = vmatpush1.msra.mxu0 %v91
    %116 = vmatprep.subr.mxu0 0.0
    %117 = vmatpush1.msra.mxu0 %v90
    %118 = vmatprep.subr.mxu0 0.0
    %119 = vmatpush1.msra.mxu0 %v89
    %120 = vmatprep.subr.mxu0 0.0
    %121 = vmatpush1.msra.mxu0 %v88
    %122 = vmatprep.subr.mxu0 0.0
    %123 = vmatpush1.msra.mxu0 %v87
    %124 = vmatprep.subr.mxu0 0.0
    %125 = vmatpush1.msra.mxu0 %v86
    %126 = vmatprep.subr.mxu0 0.0
    %127 = vmatpush1.msra.mxu0 %v85
    %128 = vmatprep.subr.mxu0 0.0
    %129 = vmatpush1.msra.mxu0 %v84
    %130 = vmatprep.subr.mxu0 0.0
    %131 = vmatpush1.msra.mxu0 %v83
    %132 = vmatprep.subr.mxu0 0.0
    %133 = vmatpush1.msra.mxu0 %v82
    %134 = vmatprep.subr.mxu0 0.0
    %135 = vmatpush1.msra.mxu0 %v81
    %136 = vmatprep.subr.mxu0 0.0
    %137 = vmatpush2.msra.mxu0 0.0
    %138 = vmatprep.subr.mxu0 0.0
    %139 = vmatpush2.msra.mxu0 0.0
    %140 = vmatprep.subr.mxu0 0.0
    %141 = vmatpush2.msra.mxu0 0.0
    %142 = vmatprep.subr.mxu0 0.0
    %143 = vmatpush2.msra.mxu0 0.0
    %144 = vmatprep.subr.mxu0 0.0
    %145 = vmatpush2.msra.mxu0 0.0
    %146 = vmatprep.subr.mxu0 0.0
    %147 = vmatpush2.msra.mxu0 0.0
    %148 = vmatprep.subr.mxu0 0.0
    %149 = vmatpush2.msra.mxu0 0.0
    %150 = vmatprep.subr.mxu0 0.0
    %151 = vmatpush2.msra.mxu0 0.0
    %152 = vmatprep.subr.mxu0 0.0
    %153 = vmatpush2.msra.mxu0 0.0
    %154 = vmatprep.subr.mxu0 0.0
    %155 = vmatpush2.msra.mxu0 0.0
    %156 = vmatprep.subr.mxu0 0.0
    %157 = vmatpush2.msra.mxu0 0.0
    %158 = vmatprep.subr.mxu0 0.0
    %159 = vmatpush2.msra.mxu0 0.0
    %160 = vmatprep.subr.mxu0 0.0
    %161 = vmatpush2.msra.mxu0 0.0
    %162 = vmatprep.subr.mxu0 0.0
    %163 = vmatpush2.msra.mxu0 0.0
    %164 = vmatprep.subr.mxu0 0.0
    %165 = vmatpush2.msra.mxu0 0.0
    %166 = vmatprep.subr.mxu0 0.0
    %167 = vmatpush2.msra.mxu0 0.0
    %168 = vmatprep.mubr.f32.mxu0 0.0
    %169 = vmatmul.mubr.f32.gmra.mxu0 %v80
    %v170 = vpop.f32.mrf.mxu0
    %v171 = vadd.f32 %v102, %v170
    %v172 = vpop.f32.mrf.mxu0
    %173 = vdwg.mxu0
    %v174 = vtanh.pop %v171
    %v175 = vld [vmem:[#allocation7] sm:$0xff]
    %v176 = vld [vmem:[#allocation7 + $0x8] sm:$0xff]
    %v177 = vld [vmem:[#allocation7 + $0x10] sm:$0xff]
    %v178 = vld [vmem:[#allocation7 + $0x18] sm:$0xff]
    %v179 = vld [vmem:[#allocation7 + $0x20] sm:$0xff]
    %v180 = vld [vmem:[#allocation7 + $0x28] sm:$0xff]
    %v181 = vld [vmem:[#allocation7 + $0x30] sm:$0xff]
    %v182 = vld [vmem:[#allocation7 + $0x38] sm:$0xff]
    %v183 = vld [vmem:[#allocation7 + $0x40] sm:$0xff]
    %v184 = vld [vmem:[#allocation7 + $0x48] sm:$0xff]
    %v185 = vld [vmem:[#allocation7 + $0x50] sm:$0xff]
    %v186 = vld [vmem:[#allocation7 + $0x58] sm:$0xff]
    %v187 = vld [vmem:[#allocation7 + $0x60] sm:$0xff]
    %v188 = vld [vmem:[#allocation7 + $0x68] sm:$0xff]
    %v189 = vld [vmem:[#allocation7 + $0x70] sm:$0xff]
    %v190 = vld [vmem:[#allocation7 + $0x78] sm:$0xff]
    %v191 = vld [vmem:[%s4] sm:$0x1]
    %v193 = vlaneseq
    %v194 = vshrl.u32 %v193, 7
    %v195 = vsub.s32 0, %v194
    %v196 = vrot.slane %v191, %v195
    %198 = vmatprep.subr.mxu0 0.0
    %199 = vmatpush1.msra.mxu0 %v190
    %200 = vmatprep.subr.mxu0 0.0
    %201 = vmatpush1.msra.mxu0 %v189
    %202 = vmatprep.subr.mxu0 0.0
    %203 = vmatpush1.msra.mxu0 %v188
    %204 = vmatprep.subr.mxu0 0.0
    %205 = vmatpush1.msra.mxu0 %v187
    %206 = vmatprep.subr.mxu0 0.0
    %207 = vmatpush1.msra.mxu0 %v186
    %208 = vmatprep.subr.mxu0 0.0
    %209 = vmatpush1.msra.mxu0 %v185
    %210 = vmatprep.subr.mxu0 0.0
    %211 = vmatpush1.msra.mxu0 %v184
    %212 = vmatprep.subr.mxu0 0.0
    %213 = vmatpush1.msra.mxu0 %v183
    %214 = vmatprep.subr.mxu0 0.0
    %215 = vmatpush1.msra.mxu0 %v182
    %216 = vmatprep.subr.mxu0 0.0
    %217 = vmatpush1.msra.mxu0 %v181
    %218 = vmatprep.subr.mxu0 0.0
    %219 = vmatpush1.msra.mxu0 %v180
    %220 = vmatprep.subr.mxu0 0.0
    %221 = vmatpush1.msra.mxu0 %v179
    %222 = vmatprep.subr.mxu0 0.0
    %223 = vmatpush1.msra.mxu0 %v178
    %224 = vmatprep.subr.mxu0 0.0
    %225 = vmatpush1.msra.mxu0 %v177
    %226 = vmatprep.subr.mxu0 0.0
    %227 = vmatpush1.msra.mxu0 %v176
    %228 = vmatprep.subr.mxu0 0.0
    %229 = vmatpush1.msra.mxu0 %v175
    %230 = vmatprep.subr.mxu0 0.0
    %231 = vmatpush2.msra.mxu0 0.0
    %232 = vmatprep.subr.mxu0 0.0
    %233 = vmatpush2.msra.mxu0 0.0
    %234 = vmatprep.subr.mxu0 0.0
    %235 = vmatpush2.msra.mxu0 0.0
    %236 = vmatprep.subr.mxu0 0.0
    %237 = vmatpush2.msra.mxu0 0.0
    %238 = vmatprep.subr.mxu0 0.0
    %239 = vmatpush2.msra.mxu0 0.0
    %240 = vmatprep.subr.mxu0 0.0
    %241 = vmatpush2.msra.mxu0 0.0
    %242 = vmatprep.subr.mxu0 0.0
    %243 = vmatpush2.msra.mxu0 0.0
    %244 = vmatprep.subr.mxu0 0.0
    %245 = vmatpush2.msra.mxu0 0.0
    %246 = vmatprep.subr.mxu0 0.0
    %247 = vmatpush2.msra.mxu0 0.0
    %248 = vmatprep.subr.mxu0 0.0
    %249 = vmatpush2.msra.mxu0 0.0
    %250 = vmatprep.subr.mxu0 0.0
    %251 = vmatpush2.msra.mxu0 0.0
    %252 = vmatprep.subr.mxu0 0.0
    %253 = vmatpush2.msra.mxu0 0.0
    %254 = vmatprep.subr.mxu0 0.0
    %255 = vmatpush2.msra.mxu0 0.0
    %256 = vmatprep.subr.mxu0 0.0
    %257 = vmatpush2.msra.mxu0 0.0
    %258 = vmatprep.subr.mxu0 0.0
    %259 = vmatpush2.msra.mxu0 0.0
    %260 = vmatprep.subr.mxu0 0.0
    %261 = vmatpush2.msra.mxu0 0.0
    %262 = vmatprep.mubr.f32.mxu0 0.0
    %263 = vmatmul.mubr.f32.gmra.mxu0 %v174
    %v264 = vpop.f32.mrf.mxu0
    %v265 = vadd.f32 %v196, %v264
    %v266 = vpop.f32.mrf.mxu0
    %267 = vdwg.mxu0
    %v268 = vmax.f32 %v265, 0.0
    %v269 = vld [vmem:[#allocation8] sm:$0xff]
    %v270 = vld [vmem:[#allocation8 + $0x8] sm:$0xff]
    %v271 = vld [vmem:[#allocation8 + $0x10] sm:$0xff]
    %v272 = vld [vmem:[#allocation8 + $0x18] sm:$0xff]
    %v273 = vld [vmem:[#allocation8 + $0x20] sm:$0xff]
    %v274 = vld [vmem:[#allocation8 + $0x28] sm:$0xff]
    %v275 = vld [vmem:[#allocation8 + $0x30] sm:$0xff]
    %v276 = vld [vmem:[#allocation8 + $0x38] sm:$0xff]
    %v277 = vld [vmem:[#allocation8 + $0x40] sm:$0xff]
    %v278 = vld [vmem:[#allocation8 + $0x48] sm:$0xff]
    %v279 = vld [vmem:[#allocation8 + $0x50] sm:$0xff]
    %v280 = vld [vmem:[#allocation8 + $0x58] sm:$0xff]
    %v281 = vld [vmem:[#allocation8 + $0x60] sm:$0xff]
    %v282 = vld [vmem:[#allocation8 + $0x68] sm:$0xff]
    %v283 = vld [vmem:[#allocation8 + $0x70] sm:$0xff]
    %v284 = vld [vmem:[#allocation8 + $0x78] sm:$0xff]
    %v285 = vld [vmem:[%s6] sm:$0x1]
    %v287 = vlaneseq
    %v288 = vshrl.u32 %v287, 7
    %v289 = vsub.s32 0, %v288
    %v290 = vrot.slane %v285, %v289
    %292 = vmatprep.subr.mxu0 0.0
    %293 = vmatpush1.msra.mxu0 %v284
    %294 = vmatprep.subr.mxu0 0.0
    %295 = vmatpush1.msra.mxu0 %v283
    %296 = vmatprep.subr.mxu0 0.0
    %297 = vmatpush1.msra.mxu0 %v282
    %298 = vmatprep.subr.mxu0 0.0
    %299 = vmatpush1.msra.mxu0 %v281
    %300 = vmatprep.subr.mxu0 0.0
    %301 = vmatpush1.msra.mxu0 %v280
    %302 = vmatprep.subr.mxu0 0.0
    %303 = vmatpush1.msra.mxu0 %v279
    %304 = vmatprep.subr.mxu0 0.0
    %305 = vmatpush1.msra.mxu0 %v278
    %306 = vmatprep.subr.mxu0 0.0
    %307 = vmatpush1.msra.mxu0 %v277
    %308 = vmatprep.subr.mxu0 0.0
    %309 = vmatpush1.msra.mxu0 %v276
    %310 = vmatprep.subr.mxu0 0.0
    %311 = vmatpush1.msra.mxu0 %v275
    %312 = vmatprep.subr.mxu0 0.0
    %313 = vmatpush1.msra.mxu0 %v274
    %314 = vmatprep.subr.mxu0 0.0
    %315 = vmatpush1.msra.mxu0 %v273
    %316 = vmatprep.subr.mxu0 0.0
    %317 = vmatpush1.msra.mxu0 %v272
    %318 = vmatprep.subr.mxu0 0.0
    %319 = vmatpush1.msra.mxu0 %v271
    %320 = vmatprep.subr.mxu0 0.0
    %321 = vmatpush1.msra.mxu0 %v270
    %322 = vmatprep.subr.mxu0 0.0
    %323 = vmatpush1.msra.mxu0 %v269
    %324 = vmatprep.subr.mxu0 0.0
    %325 = vmatpush2.msra.mxu0 0.0
    %326 = vmatprep.subr.mxu0 0.0
    %327 = vmatpush2.msra.mxu0 0.0
    %328 = vmatprep.subr.mxu0 0.0
    %329 = vmatpush2.msra.mxu0 0.0
    %330 = vmatprep.subr.mxu0 0.0
    %331 = vmatpush2.msra.mxu0 0.0
    %332 = vmatprep.subr.mxu0 0.0
    %333 = vmatpush2.msra.mxu0 0.0
    %334 = vmatprep.subr.mxu0 0.0
    %335 = vmatpush2.msra.mxu0 0.0
    %336 = vmatprep.subr.mxu0 0.0
    %337 = vmatpush2.msra.mxu0 0.0
    %338 = vmatprep.subr.mxu0 0.0
    %339 = vmatpush2.msra.mxu0 0.0
    %340 = vmatprep.subr.mxu0 0.0
    %341 = vmatpush2.msra.mxu0 0.0
    %342 = vmatprep.subr.mxu0 0.0
    %343 = vmatpush2.msra.mxu0 0.0
    %344 = vmatprep.subr.mxu0 0.0
    %345 = vmatpush2.msra.mxu0 0.0
    %346 = vmatprep.subr.mxu0 0.0
    %347 = vmatpush2.msra.mxu0 0.0
    %348 = vmatprep.subr.mxu0 0.0
    %349 = vmatpush2.msra.mxu0 0.0
    %350 = vmatprep.subr.mxu0 0.0
    %351 = vmatpush2.msra.mxu0 0.0
    %352 = vmatprep.subr.mxu0 0.0
    %353 = vmatpush2.msra.mxu0 0.0
    %354 = vmatprep.subr.mxu0 0.0
    %355 = vmatpush2.msra.mxu0 0.0
    %356 = vmatprep.mubr.f32.mxu0 0.0
    %357 = vmatmul.mubr.f32.gmra.mxu0 %v268
    %v358 = vpop.f32.mrf.mxu0
    %v359 = vadd.f32 %v290, %v358
    %v360 = vpop.f32.mrf.mxu0
    %361 = vdwg.mxu0
    %362 = vst [vmem:[#allocation10] sm:$0xff] %v359
    // Predicated region
    $region46: #{tpu_custom_call.1} parent=1 // pred_check
      _
    $region47: #{tpu_custom_call.1} parent=1 // pred_check_branch
      %364 = sbr.rel (0) target = $region49
    $region48: #{tpu_custom_call.1} parent=1 // pred_region
      %s366 = ssub.s32 128, 128
      %367 = vsyncadd [#allocation4], %s366
      %s369 = sshll.u32 [#allocation10], 4
      %s370 = int_to_ptr.vmem [resolvable:$true] %s369
      %372 = dma.vmem_to_hbm [thread:$0]  %s370, 128, %s7, [#allocation4]
    $region49: #{tpu_custom_call.1} parent=1 // pred_fallthru
      _
    // Predicated region
    $region50: #{tpu_custom_call.1} parent=1 // pred_check
      _
    $region51: #{tpu_custom_call.1} parent=1 // pred_check_branch
      %374 = sbr.rel (0) target = $region53
    $region52: #{tpu_custom_call.1} parent=1 // pred_region
      %375 = dma.done [#allocation4], 128
    $region53: #{tpu_custom_call.1} parent=1 // pred_fallthru
      _
    %376 = vsyncpa [#allocation3], 1
    %377 = vsyncpa [#allocation6], 1
    %378 = vsyncpa [#allocation9], 1
    %379 = vsyncpa [#allocation4], 1

// kernel: tpu_custom_call.1
$region0: #{tpu_custom_call.1}
  #allocation0 [shape = 'u32[]', space=smem, size = 0x4, offset = 0x4, fixed_abs, tag = 'smem constant byte address 0x4 - core index']
  #allocation1 [shape = 'u32[144,128]{1,0:T(1,128)}', space=vmem, size = 0x12000, scoped, tag = 'internal scratch']
  %s0 = inlined_call_operand.hbm [shape: f32[8,128], index: 0, kind: input, shape index: {}]
  %s1 = inlined_call_operand.hbm [shape: f32[128,128], index: 1, kind: input, shape index: {}]
  %s2 = inlined_call_operand.vmem [shape: f32[1,128], index: 2, kind: input, shape index: {}]
  %s3 = inlined_call_operand.hbm [shape: f32[128,128], index: 3, kind: input, shape index: {}]
  %s4 = inlined_call_operand.vmem [shape: f32[1,128], index: 4, kind: input, shape index: {}]
  %s5 = inlined_call_operand.hbm [shape: f32[128,128], index: 5, kind: input, shape index: {}]
  %s6 = inlined_call_operand.vmem [shape: f32[1,128], index: 6, kind: input, shape index: {}]
  %s7 = inlined_call_operand.hbm [shape: f32[8,128], index: 7, kind: output, shape index: {}]
  %s8 = sld [smem:[#allocation0]]
  $region54: #{tpu_custom_call.1} parent=0
    _
  %s10 = ssub.s32 1, %s8
  %s11 = scalar_select 0, %s10, %s8
  $region1: #{tpu_custom_call.1} parent=0
    #allocation2 [shape = 'u8[4096]{0}', space=vmem, size = 0x1000, scoped, tag = 'input window, operand 0, single buffered']
    #allocation3 [shape = 's32[1]{0}', space=sflag, size = 0x4, scoped, tag = 'scoped memory for tpu_custom_call.1']
    #allocation4 [shape = 's32[1]{0}', space=sflag, size = 0x4, scoped, tag = 'scoped memory for tpu_custom_call.1']
    #allocation5 [shape = 'u8[65536]{0}', space=vmem, size = 0x10000, scoped, tag = 'input window, operand 1, single buffered']
    #allocation6 [shape = 's32[1]{0}', space=sflag, size = 0x4, scoped, tag = 'scoped memory for tpu_custom_call.1']
    #allocation7 [shape = 'u8[65536]{0}', space=vmem, size = 0x10000, scoped, tag = 'input window, operand 3, single buffered']
    #allocation8 [shape = 'u8[65536]{0}', space=vmem, size = 0x10000, scoped, tag = 'input window, operand 5, single buffered']
    #allocation9 [shape = 's32[1]{0}', space=sflag, size = 0x4, scoped, tag = 'scoped memory for tpu_custom_call.1']
    #allocation10 [shape = 'u8[4096]{0}', space=vmem, size = 0x1000, scoped, tag = 'output window, operand 0, single buffered']
    %12 = vsyncpa [#allocation3], 0
    %13 = vsyncpa [#allocation6], 0
    %14 = vsyncpa [#allocation9], 0
    %15 = vsyncpa [#allocation4], 0
    // Predicated region
    $region2: #{tpu_custom_call.1} parent=1 // pred_check
      _
    $region3: #{tpu_custom_call.1} parent=1 // pred_check_branch
      %17 = sbr.rel (0) target = $region5
    $region4: #{tpu_custom_call.1} parent=1 // pred_region
      %s19 = ssub.s32 128, 128
      %20 = vsyncadd [#allocation3], %s19
      %s22 = sshll.u32 [#allocation2], 4
      %s23 = int_to_ptr.vmem [resolvable:$true] %s22
      %25 = dma.hbm_to_vmem [thread:$0]  %s0, 128, %s23, [#allocation3]
    $region5: #{tpu_custom_call.1} parent=1 // pred_fallthru
      _
    // Predicated region
    $region6: #{tpu_custom_call.1} parent=1 // pred_check
      _
    $region7: #{tpu_custom_call.1} parent=1 // pred_check_branch
      %27 = sbr.rel (0) target = $region9
    $region8: #{tpu_custom_call.1} parent=1 // pred_region
      %s29 = ssub.s32 2048, 2048
      %30 = vsyncadd [#allocation6], %s29
      %s31 = sshll.u32 [#allocation5], 4
      %s32 = int_to_ptr.vmem [resolvable:$true] %s31
      %37 = dma.hbm_to_vmem [thread:$0]  %s1, 2048, %s32, [#allocation6], 128, 128, 8
    $region9: #{tpu_custom_call.1} parent=1 // pred_fallthru
      _
    // Predicated region
    $region10: #{tpu_custom_call.1} parent=1 // pred_check
      _
    $region11: #{tpu_custom_call.1} parent=1 // pred_check_branch
      %39 = sbr.rel (0) target = $region13
    $region12: #{tpu_custom_call.1} parent=1 // pred_region
      _
    $region13: #{tpu_custom_call.1} parent=1 // pred_fallthru
      _
    // Predicated region
    $region14: #{tpu_custom_call.1} parent=1 // pred_check
      _
    $region15: #{tpu_custom_call.1} parent=1 // pred_check_branch
      %41 = sbr.rel (0) target = $region17
    $region16: #{tpu_custom_call.1} parent=1 // pred_region
      %s43 = ssub.s32 2048, 2048
      %44 = vsyncadd [#allocation6], %s43
      %s45 = sshll.u32 [#allocation7], 4
      %s46 = int_to_ptr.vmem [resolvable:$true] %s45
      %51 = dma.hbm_to_vmem [thread:$0]  %s3, 2048, %s46, [#allocation6], 128, 128, 8
    $region17: #{tpu_custom_call.1} parent=1 // pred_fallthru
      _
    // Predicated region
    $region18: #{tpu_custom_call.1} parent=1 // pred_check
      _
    $region19: #{tpu_custom_call.1} parent=1 // pred_check_branch
      %53 = sbr.rel (0) target = $region21
    $region20: #{tpu_custom_call.1} parent=1 // pred_region
      _
    $region21: #{tpu_custom_call.1} parent=1 // pred_fallthru
      _
    // Predicated region
    $region22: #{tpu_custom_call.1} parent=1 // pred_check
      _
    $region23: #{tpu_custom_call.1} parent=1 // pred_check_branch
      %55 = sbr.rel (0) target = $region25
    $region24: #{tpu_custom_call.1} parent=1 // pred_region
      %s57 = ssub.s32 2048, 2048
      %58 = vsyncadd [#allocation9], %s57
      %s59 = sshll.u32 [#allocation8], 4
      %s60 = int_to_ptr.vmem [resolvable:$true] %s59
      %65 = dma.hbm_to_vmem [thread:$0]  %s5, 2048, %s60, [#allocation9], 128, 128, 8
    $region25: #{tpu_custom_call.1} parent=1 // pred_fallthru
      _
    // Predicated region
    $region26: #{tpu_custom_call.1} parent=1 // pred_check
      _
    $region27: #{tpu_custom_call.1} parent=1 // pred_check_branch
      %67 = sbr.rel (0) target = $region29
    $region28: #{tpu_custom_call.1} parent=1 // pred_region
      _
    $region29: #{tpu_custom_call.1} parent=1 // pred_fallthru
      _
    // Predicated region
    $region30: #{tpu_custom_call.1} parent=1 // pred_check
      _
    $region31: #{tpu_custom_call.1} parent=1 // pred_check_branch
      %69 = sbr.rel (0) target = $region33
    $region32: #{tpu_custom_call.1} parent=1 // pred_region
      %70 = dma.done [#allocation3], 128
    $region33: #{tpu_custom_call.1} parent=1 // pred_fallthru
      _
    // Predicated region
    $region34: #{tpu_custom_call.1} parent=1 // pred_check
      _
    $region35: #{tpu_custom_call.1} parent=1 // pred_check_branch
      %72 = sbr.rel (0) target = $region37
    $region36: #{tpu_custom_call.1} parent=1 // pred_region
      %73 = dma.done [#allocation6], 2048
    $region37: #{tpu_custom_call.1} parent=1 // pred_fallthru
      _
    // Predicated region
    $region38: #{tpu_custom_call.1} parent=1 // pred_check
      _
    $region39: #{tpu_custom_call.1} parent=1 // pred_check_branch
      %75 = sbr.rel (0) target = $region41
    $region40: #{tpu_custom_call.1} parent=1 // pred_region
      %76 = dma.done [#allocation6], 2048
    $region41: #{tpu_custom_call.1} parent=1 // pred_fallthru
      _
    // Predicated region
    $region42: #{tpu_custom_call.1} parent=1 // pred_check
      _
    $region43: #{tpu_custom_call.1} parent=1 // pred_check_branch
      %78 = sbr.rel (0) target = $region45
    $region44: #{tpu_custom_call.1} parent=1 // pred_region
      %79 = dma.done [#allocation9], 2048
    $region45: #{tpu_custom_call.1} parent=1 // pred_fallthru
      _
    %v80 = vld [vmem:[#allocation2] sm:$0xff]
    %v81 = vld [vmem:[#allocation5] sm:$0xff]
    %v82 = vld [vmem:[#allocation5 + $0x8] sm:$0xff]
    %v83 = vld [vmem:[#allocation5 + $0x10] sm:$0xff]
    %v84 = vld [vmem:[#allocation5 + $0x18] sm:$0xff]
    %v85 = vld [vmem:[#allocation5 + $0x20] sm:$0xff]
    %v86 = vld [vmem:[#allocation5 + $0x28] sm:$0xff]
    %v87 = vld [vmem:[#allocation5 + $0x30] sm:$0xff]
    %v88 = vld [vmem:[#allocation5 + $0x38] sm:$0xff]
    %v89 = vld [vmem:[#allocation5 + $0x40] sm:$0xff]
    %v90 = vld [vmem:[#allocation5 + $0x48] sm:$0xff]
    %v91 = vld [vmem:[#allocation5 + $0x50] sm:$0xff]
    %v92 = vld [vmem:[#allocation5 + $0x58] sm:$0xff]
    %v93 = vld [vmem:[#allocation5 + $0x60] sm:$0xff]
    %v94 = vld [vmem:[#allocation5 + $0x68] sm:$0xff]
    %v95 = vld [vmem:[#allocation5 + $0x70] sm:$0xff]
    %v96 = vld [vmem:[#allocation5 + $0x78] sm:$0xff]
    %v97 = vld [vmem:[%s2] sm:$0x1]
    %v99 = vlaneseq
    %v100 = vshrl.u32 %v99, 7
    %v101 = vsub.s32 0, %v100
    %v102 = vrot.slane %v97, %v101
    %104 = vmatprep.subr.mxu0 0.0
    %105 = vmatpush1.msra.mxu0 %v96
    %106 = vmatprep.subr.mxu0 0.0
    %107 = vmatpush1.msra.mxu0 %v95
    %108 = vmatprep.subr.mxu0 0.0
    %109 = vmatpush1.msra.mxu0 %v94
    %110 = vmatprep.subr.mxu0 0.0
    %111 = vmatpush1.msra.mxu0 %v93
    %112 = vmatprep.subr.mxu0 0.0
    %113 = vmatpush1.msra.mxu0 %v92
    %114 = vmatprep.subr.mxu0 0.0
    %115 = vmatpush1.msra.mxu0 %v91
    %116 = vmatprep.subr.mxu0 0.0
    %117 = vmatpush1.msra.mxu0 %v90
    %118 = vmatprep.subr.mxu0 0.0
    %119 = vmatpush1.msra.mxu0 %v89
    %120 = vmatprep.subr.mxu0 0.0
    %121 = vmatpush1.msra.mxu0 %v88
    %122 = vmatprep.subr.mxu0 0.0
    %123 = vmatpush1.msra.mxu0 %v87
    %124 = vmatprep.subr.mxu0 0.0
    %125 = vmatpush1.msra.mxu0 %v86
    %126 = vmatprep.subr.mxu0 0.0
    %127 = vmatpush1.msra.mxu0 %v85
    %128 = vmatprep.subr.mxu0 0.0
    %129 = vmatpush1.msra.mxu0 %v84
    %130 = vmatprep.subr.mxu0 0.0
    %131 = vmatpush1.msra.mxu0 %v83
    %132 = vmatprep.subr.mxu0 0.0
    %133 = vmatpush1.msra.mxu0 %v82
    %134 = vmatprep.subr.mxu0 0.0
    %135 = vmatpush1.msra.mxu0 %v81
    %136 = vmatprep.subr.mxu0 0.0
    %137 = vmatpush2.msra.mxu0 0.0
    %138 = vmatprep.subr.mxu0 0.0
    %139 = vmatpush2.msra.mxu0 0.0
    %140 = vmatprep.subr.mxu0 0.0
    %141 = vmatpush2.msra.mxu0 0.0
    %142 = vmatprep.subr.mxu0 0.0
    %143 = vmatpush2.msra.mxu0 0.0
    %144 = vmatprep.subr.mxu0 0.0
    %145 = vmatpush2.msra.mxu0 0.0
    %146 = vmatprep.subr.mxu0 0.0
    %147 = vmatpush2.msra.mxu0 0.0
    %148 = vmatprep.subr.mxu0 0.0
    %149 = vmatpush2.msra.mxu0 0.0
    %150 = vmatprep.subr.mxu0 0.0
    %151 = vmatpush2.msra.mxu0 0.0
    %152 = vmatprep.subr.mxu0 0.0
    %153 = vmatpush2.msra.mxu0 0.0
    %154 = vmatprep.subr.mxu0 0.0
    %155 = vmatpush2.msra.mxu0 0.0
    %156 = vmatprep.subr.mxu0 0.0
    %157 = vmatpush2.msra.mxu0 0.0
    %158 = vmatprep.subr.mxu0 0.0
    %159 = vmatpush2.msra.mxu0 0.0
    %160 = vmatprep.subr.mxu0 0.0
    %161 = vmatpush2.msra.mxu0 0.0
    %162 = vmatprep.subr.mxu0 0.0
    %163 = vmatpush2.msra.mxu0 0.0
    %164 = vmatprep.subr.mxu0 0.0
    %165 = vmatpush2.msra.mxu0 0.0
    %166 = vmatprep.subr.mxu0 0.0
    %167 = vmatpush2.msra.mxu0 0.0
    %168 = vmatprep.mubr.f32.mxu0 0.0
    %169 = vmatmul.mubr.f32.gmra.mxu0 %v80
    %v170 = vpop.f32.mrf.mxu0
    %v171 = vadd.f32 %v102, %v170
    %v172 = vpop.f32.mrf.mxu0
    %173 = vdwg.mxu0
    %v174 = vtanh.pop %v171
    %v175 = vld [vmem:[#allocation7] sm:$0xff]
    %v176 = vld [vmem:[#allocation7 + $0x8] sm:$0xff]
    %v177 = vld [vmem:[#allocation7 + $0x10] sm:$0xff]
    %v178 = vld [vmem:[#allocation7 + $0x18] sm:$0xff]
    %v179 = vld [vmem:[#allocation7 + $0x20] sm:$0xff]
    %v180 = vld [vmem:[#allocation7 + $0x28] sm:$0xff]
    %v181 = vld [vmem:[#allocation7 + $0x30] sm:$0xff]
    %v182 = vld [vmem:[#allocation7 + $0x38] sm:$0xff]
    %v183 = vld [vmem:[#allocation7 + $0x40] sm:$0xff]
    %v184 = vld [vmem:[#allocation7 + $0x48] sm:$0xff]
    %v185 = vld [vmem:[#allocation7 + $0x50] sm:$0xff]
    %v186 = vld [vmem:[#allocation7 + $0x58] sm:$0xff]
    %v187 = vld [vmem:[#allocation7 + $0x60] sm:$0xff]
    %v188 = vld [vmem:[#allocation7 + $0x68] sm:$0xff]
    %v189 = vld [vmem:[#allocation7 + $0x70] sm:$0xff]
    %v190 = vld [vmem:[#allocation7 + $0x78] sm:$0xff]
    %v191 = vld [vmem:[%s4] sm:$0x1]
    %v193 = vlaneseq
    %v194 = vshrl.u32 %v193, 7
    %v195 = vsub.s32 0, %v194
    %v196 = vrot.slane %v191, %v195
    %198 = vmatprep.subr.mxu0 0.0
    %199 = vmatpush1.msra.mxu0 %v190
    %200 = vmatprep.subr.mxu0 0.0
    %201 = vmatpush1.msra.mxu0 %v189
    %202 = vmatprep.subr.mxu0 0.0
    %203 = vmatpush1.msra.mxu0 %v188
    %204 = vmatprep.subr.mxu0 0.0
    %205 = vmatpush1.msra.mxu0 %v187
    %206 = vmatprep.subr.mxu0 0.0
    %207 = vmatpush1.msra.mxu0 %v186
    %208 = vmatprep.subr.mxu0 0.0
    %209 = vmatpush1.msra.mxu0 %v185
    %210 = vmatprep.subr.mxu0 0.0
    %211 = vmatpush1.msra.mxu0 %v184
    %212 = vmatprep.subr.mxu0 0.0
    %213 = vmatpush1.msra.mxu0 %v183
    %214 = vmatprep.subr.mxu0 0.0
    %215 = vmatpush1.msra.mxu0 %v182
    %216 = vmatprep.subr.mxu0 0.0
    %217 = vmatpush1.msra.mxu0 %v181
    %218 = vmatprep.subr.mxu0 0.0
    %219 = vmatpush1.msra.mxu0 %v180
    %220 = vmatprep.subr.mxu0 0.0
    %221 = vmatpush1.msra.mxu0 %v179
    %222 = vmatprep.subr.mxu0 0.0
    %223 = vmatpush1.msra.mxu0 %v178
    %224 = vmatprep.subr.mxu0 0.0
    %225 = vmatpush1.msra.mxu0 %v177
    %226 = vmatprep.subr.mxu0 0.0
    %227 = vmatpush1.msra.mxu0 %v176
    %228 = vmatprep.subr.mxu0 0.0
    %229 = vmatpush1.msra.mxu0 %v175
    %230 = vmatprep.subr.mxu0 0.0
    %231 = vmatpush2.msra.mxu0 0.0
    %232 = vmatprep.subr.mxu0 0.0
    %233 = vmatpush2.msra.mxu0 0.0
    %234 = vmatprep.subr.mxu0 0.0
    %235 = vmatpush2.msra.mxu0 0.0
    %236 = vmatprep.subr.mxu0 0.0
    %237 = vmatpush2.msra.mxu0 0.0
    %238 = vmatprep.subr.mxu0 0.0
    %239 = vmatpush2.msra.mxu0 0.0
    %240 = vmatprep.subr.mxu0 0.0
    %241 = vmatpush2.msra.mxu0 0.0
    %242 = vmatprep.subr.mxu0 0.0
    %243 = vmatpush2.msra.mxu0 0.0
    %244 = vmatprep.subr.mxu0 0.0
    %245 = vmatpush2.msra.mxu0 0.0
    %246 = vmatprep.subr.mxu0 0.0
    %247 = vmatpush2.msra.mxu0 0.0
    %248 = vmatprep.subr.mxu0 0.0
    %249 = vmatpush2.msra.mxu0 0.0
    %250 = vmatprep.subr.mxu0 0.0
    %251 = vmatpush2.msra.mxu0 0.0
    %252 = vmatprep.subr.mxu0 0.0
    %253 = vmatpush2.msra.mxu0 0.0
    %254 = vmatprep.subr.mxu0 0.0
    %255 = vmatpush2.msra.mxu0 0.0
    %256 = vmatprep.subr.mxu0 0.0
    %257 = vmatpush2.msra.mxu0 0.0
    %258 = vmatprep.subr.mxu0 0.0
    %259 = vmatpush2.msra.mxu0 0.0
    %260 = vmatprep.subr.mxu0 0.0
    %261 = vmatpush2.msra.mxu0 0.0
    %262 = vmatprep.mubr.f32.mxu0 0.0
    %263 = vmatmul.mubr.f32.gmra.mxu0 %v174
    %v264 = vpop.f32.mrf.mxu0
    %v265 = vadd.f32 %v196, %v264
    %v266 = vpop.f32.mrf.mxu0
    %267 = vdwg.mxu0
    %v268 = vmax.f32 %v265, 0.0
    %v269 = vld [vmem:[#allocation8] sm:$0xff]
    %v270 = vld [vmem:[#allocation8 + $0x8] sm:$0xff]
    %v271 = vld [vmem:[#allocation8 + $0x10] sm:$0xff]
    %v272 = vld [vmem:[#allocation8 + $0x18] sm:$0xff]
    %v273 = vld [vmem:[#allocation8 + $0x20] sm:$0xff]
    %v274 = vld [vmem:[#allocation8 + $0x28] sm:$0xff]
    %v275 = vld [vmem:[#allocation8 + $0x30] sm:$0xff]
    %v276 = vld [vmem:[#allocation8 + $0x38] sm:$0xff]
    %v277 = vld [vmem:[#allocation8 + $0x40] sm:$0xff]
    %v278 = vld [vmem:[#allocation8 + $0x48] sm:$0xff]
    %v279 = vld [vmem:[#allocation8 + $0x50] sm:$0xff]
    %v280 = vld [vmem:[#allocation8 + $0x58] sm:$0xff]
    %v281 = vld [vmem:[#allocation8 + $0x60] sm:$0xff]
    %v282 = vld [vmem:[#allocation8 + $0x68] sm:$0xff]
    %v283 = vld [vmem:[#allocation8 + $0x70] sm:$0xff]
    %v284 = vld [vmem:[#allocation8 + $0x78] sm:$0xff]
    %v285 = vld [vmem:[%s6] sm:$0x1]
    %v287 = vlaneseq
    %v288 = vshrl.u32 %v287, 7
    %v289 = vsub.s32 0, %v288
    %v290 = vrot.slane %v285, %v289
    %292 = vmatprep.subr.mxu0 0.0
    %293 = vmatpush1.msra.mxu0 %v284
    %294 = vmatprep.subr.mxu0 0.0
    %295 = vmatpush1.msra.mxu0 %v283
    %296 = vmatprep.subr.mxu0 0.0
    %297 = vmatpush1.msra.mxu0 %v282
    %298 = vmatprep.subr.mxu0 0.0
    %299 = vmatpush1.msra.mxu0 %v281
    %300 = vmatprep.subr.mxu0 0.0
    %301 = vmatpush1.msra.mxu0 %v280
    %302 = vmatprep.subr.mxu0 0.0
    %303 = vmatpush1.msra.mxu0 %v279
    %304 = vmatprep.subr.mxu0 0.0
    %305 = vmatpush1.msra.mxu0 %v278
    %306 = vmatprep.subr.mxu0 0.0
    %307 = vmatpush1.msra.mxu0 %v277
    %308 = vmatprep.subr.mxu0 0.0
    %309 = vmatpush1.msra.mxu0 %v276
    %310 = vmatprep.subr.mxu0 0.0
    %311 = vmatpush1.msra.mxu0 %v275
    %312 = vmatprep.subr.mxu0 0.0
    %313 = vmatpush1.msra.mxu0 %v274
    %314 = vmatprep.subr.mxu0 0.0
    %315 = vmatpush1.msra.mxu0 %v273
    %316 = vmatprep.subr.mxu0 0.0
    %317 = vmatpush1.msra.mxu0 %v272
    %318 = vmatprep.subr.mxu0 0.0
    %319 = vmatpush1.msra.mxu0 %v271
    %320 = vmatprep.subr.mxu0 0.0
    %321 = vmatpush1.msra.mxu0 %v270
    %322 = vmatprep.subr.mxu0 0.0
    %323 = vmatpush1.msra.mxu0 %v269
    %324 = vmatprep.subr.mxu0 0.0
    %325 = vmatpush2.msra.mxu0 0.0
    %326 = vmatprep.subr.mxu0 0.0
    %327 = vmatpush2.msra.mxu0 0.0
    %328 = vmatprep.subr.mxu0 0.0
    %329 = vmatpush2.msra.mxu0 0.0
    %330 = vmatprep.subr.mxu0 0.0
    %331 = vmatpush2.msra.mxu0 0.0
    %332 = vmatprep.subr.mxu0 0.0
    %333 = vmatpush2.msra.mxu0 0.0
    %334 = vmatprep.subr.mxu0 0.0
    %335 = vmatpush2.msra.mxu0 0.0
    %336 = vmatprep.subr.mxu0 0.0
    %337 = vmatpush2.msra.mxu0 0.0
    %338 = vmatprep.subr.mxu0 0.0
    %339 = vmatpush2.msra.mxu0 0.0
    %340 = vmatprep.subr.mxu0 0.0
    %341 = vmatpush2.msra.mxu0 0.0
    %342 = vmatprep.subr.mxu0 0.0
    %343 = vmatpush2.msra.mxu0 0.0
    %344 = vmatprep.subr.mxu0 0.0
    %345 = vmatpush2.msra.mxu0 0.0
    %346 = vmatprep.subr.mxu0 0.0
    %347 = vmatpush2.msra.mxu0 0.0
    %348 = vmatprep.subr.mxu0 0.0
    %349 = vmatpush2.msra.mxu0 0.0
    %350 = vmatprep.subr.mxu0 0.0
    %351 = vmatpush2.msra.mxu0 0.0
    %352 = vmatprep.subr.mxu0 0.0
    %353 = vmatpush2.msra.mxu0 0.0
    %354 = vmatprep.subr.mxu0 0.0
    %355 = vmatpush2.msra.mxu0 0.0
    %356 = vmatprep.mubr.f32.mxu0 0.0
    %357 = vmatmul.mubr.f32.gmra.mxu0 %v268
    %v358 = vpop.f32.mrf.mxu0
    %v359 = vadd.f32 %v290, %v358
    %v360 = vpop.f32.mrf.mxu0
    %361 = vdwg.mxu0
    %362 = vst [vmem:[#allocation10] sm:$0xff] %v359
    // Predicated region
    $region46: #{tpu_custom_call.1} parent=1 // pred_check
      _
    $region47: #{tpu_custom_call.1} parent=1 // pred_check_branch
      %364 = sbr.rel (0) target = $region49
    $region48: #{tpu_custom_call.1} parent=1 // pred_region
      %s366 = ssub.s32 128, 128
      %367 = vsyncadd [#allocation4], %s366
      %s369 = sshll.u32 [#allocation10], 4
      %s370 = int_to_ptr.vmem [resolvable:$true] %s369
      %372 = dma.vmem_to_hbm [thread:$0]  %s370, 128, %s7, [#allocation4]
    $region49: #{tpu_custom_call.1} parent=1 // pred_fallthru
      _
    // Predicated region
    $region50: #{tpu_custom_call.1} parent=1 // pred_check
      _
    $region51: #{tpu_custom_call.1} parent=1 // pred_check_branch
      %374 = sbr.rel (0) target = $region53
    $region52: #{tpu_custom_call.1} parent=1 // pred_region
      %375 = dma.done [#allocation4], 128
    $region53: #{tpu_custom_call.1} parent=1 // pred_fallthru
      _
    %376 = vsyncpa [#allocation3], 1
    %377 = vsyncpa [#allocation6], 1
    %378 = vsyncpa [#allocation9], 1
    %379 = vsyncpa [#allocation4], 1

</llo_original>
